<compile_context>
chip_gen: v7x
topology: tpu7x:2x2x1
jax: 0.10.0
libtpu: 0.0.40
codegen_flags: <defaults>
</compile_context>

<pallas_src>
import jax
import jax.numpy as jnp
from jax.experimental import pallas as pl
from jax.experimental.pallas import tpu as pltpu


NEG_SLOPE = 0.01   # nn.LeakyReLU default negative_slope
SUBLANE = 8


def _round_up(x, m):
    return ((x + m - 1) // m) * m


def _leaky_relu(x):
    return jnp.where(x > 0, x, NEG_SLOPE * x)


def policy_kernel(x_ref, w1_ref, b1_ref, w2_ref, b2_ref, w3_ref, b3_ref, o_ref):
    """One batch tile: 3x (matmul + bias), LeakyReLU twice, softmax over actions."""
    w_dtype = w1_ref.dtype
    x = x_ref[...]

    # Linear 1 + LeakyReLU  (f32 accumulation on the MXU)
    h = jnp.dot(x.astype(w_dtype), w1_ref[...],
                preferred_element_type=jnp.float32) + b1_ref[...]
    h = _leaky_relu(h)

    # Linear 2 + LeakyReLU
    h = jnp.dot(h.astype(w_dtype), w2_ref[...],
                preferred_element_type=jnp.float32) + b2_ref[...]
    h = _leaky_relu(h)

    # Linear 3 -> logits (real nb_actions lanes; no padding, no mask needed)
    logits = jnp.dot(h.astype(w_dtype), w3_ref[...],
                     preferred_element_type=jnp.float32) + b3_ref[...]

    # Numerically stable softmax with an exact divide (kernel is memory-bound;
    # exact keeps row sums == 1 for downstream sampling / log-probs).
    m = jnp.max(logits, axis=-1, keepdims=True)
    e = jnp.exp(logits - m)
    denom = jnp.sum(e, axis=-1, keepdims=True)
    o_ref[...] = (e / denom).astype(o_ref.dtype)


def discrete_policy_forward(obs, params, *, batch_block=2048):
    """obs: [B, input_size]; params: dict of pre-transposed weights / biases.

    batch_block: max rows per grid step.  2048 rows of f32 activations is only a
    few MiB of VMEM (well under the 32 MiB scoped default on v5e/v6e/v7x) while
    amortizing the per-step overhead; it is further capped so large batches keep
    >= 2 grid steps (v7x megacore sharding via dimension_semantics="parallel").
    """
    w1, b1, w2, b2, w3, b3 = (params["w1"], params["b1"], params["w2"],
                              params["b2"], params["w3"], params["b3"])
    B, in_features = obs.shape
    hidden = w1.shape[1]
    nb_actions = w3.shape[1]

    # Batch tile selection (no batch padding; remainder handled by a partial block).
    if B <= SUBLANE:
        tb = B                                               # full batch, one step
    else:
        two_step_cap = _round_up(pl.cdiv(B, 2), SUBLANE)     # keep >= 2 steps (v7x: 2 TCs)
        tb = min(batch_block, two_step_cap, B)               # multiple of 8 unless == B
    grid = (pl.cdiv(B, tb),)

    const = lambda i: (0, 0)   # weights/biases: same block every step -> VMEM-resident

    return pl.pallas_call(
        policy_kernel,
        out_shape=jax.ShapeDtypeStruct((B, nb_actions), jnp.float32),
        grid=grid,
        in_specs=[
            pl.BlockSpec((tb, in_features), lambda i: (i, 0)),   # obs tile
            pl.BlockSpec((in_features, hidden), const),          # w1
            pl.BlockSpec((1, hidden), const),                    # b1
            pl.BlockSpec((hidden, hidden), const),               # w2
            pl.BlockSpec((1, hidden), const),                    # b2
            pl.BlockSpec((hidden, nb_actions), const),           # w3
            pl.BlockSpec((1, nb_actions), const),                # b3
        ],
        out_specs=pl.BlockSpec((tb, nb_actions), lambda i: (i, 0)),
        compiler_params=pltpu.CompilerParams(
            dimension_semantics=("parallel",)),                  # shard batch across TCs
    )(obs, w1, b1, w2, b2, w3, b3)


def init_params(key, input_size, hidden_size, nb_actions, param_dtype=jnp.float32):
    """Deterministic init mimicking nn.Linear's U(-1/sqrt(fan_in), 1/sqrt(fan_in)).

    Weights are stored transposed ([in, out]) and in their final layout so the
    forward pass does no per-call padding/transposition.  param_dtype=jnp.bfloat16
    halves resident weight VMEM / DMA and triples MXU throughput (f32 accumulation
    is kept inside the kernel); biases stay f32.
    """
    ks = jax.random.split(key, 6)

    def linear(kw, kb, fan_in, fan_out):
        bound = 1.0 / jnp.sqrt(jnp.float32(fan_in))
        w = jax.random.uniform(kw, (fan_in, fan_out), jnp.float32, -bound, bound)
        b = jax.random.uniform(kb, (1, fan_out), jnp.float32, -bound, bound)
        return w.astype(param_dtype), b.astype(jnp.float32)

    w1, b1 = linear(ks[0], ks[1], input_size, hidden_size)
    w2, b2 = linear(ks[2], ks[3], hidden_size, hidden_size)
    w3, b3 = linear(ks[4], ks[5], hidden_size, nb_actions)
    return dict(w1=w1, b1=b1, w2=w2, b2=b2, w3=w3, b3=b3)


if __name__ == "__main__":
    key = jax.random.PRNGKey(0)
    k_obs, k_par = jax.random.split(key)

    batch, input_size, hidden_size, nb_actions = 8, 16, 32, 4
    obs = jax.random.normal(k_obs, (batch, input_size), jnp.float32)

    # Reference in plain JAX (same math as the PyTorch module).
    def ref(x, p):
        h = x @ p["w1"].astype(jnp.float32) + p["b1"]
        h = jnp.where(h > 0, h, NEG_SLOPE * h)
        h = h @ p["w2"].astype(jnp.float32) + p["b2"]
        h = jnp.where(h > 0, h, NEG_SLOPE * h)
        logits = h @ p["w3"].astype(jnp.float32) + p["b3"]
        return jax.nn.softmax(logits, axis=-1)

    # f32 weights: tight numerical check.
    params = init_params(k_par, input_size, hidden_size, nb_actions)
    out = jax.block_until_ready(discrete_policy_forward(obs, params))
    expected = ref(obs, params)
    assert out.shape == (batch, nb_actions)
    assert jnp.allclose(out, expected, atol=1e-4, rtol=1e-4), \
        float(jnp.max(jnp.abs(out - expected)))
    assert jnp.allclose(jnp.sum(out, axis=-1), 1.0, atol=1e-4)

    # bf16 weight storage (recommended for production): looser smoke check.
    params_bf16 = init_params(k_par, input_size, hidden_size, nb_actions,
                              param_dtype=jnp.bfloat16)
    out_bf16 = jax.block_until_ready(discrete_policy_forward(obs, params_bf16))
    assert out_bf16.shape == (batch, nb_actions)
    assert jnp.allclose(jnp.sum(out_bf16, axis=-1), 1.0, atol=1e-2)
    assert jnp.allclose(out_bf16, expected, atol=5e-2, rtol=5e-2)

    print("KERNEL_OK")
</pallas_src>

<mosaic_0001>
module attributes {stable_mosaic.version = 11 : i64} {
  func.func @policy_kernel(%arg0: i32, %arg1: memref<8x16xf32, #tpu.memory_space<vmem>>, %arg2: memref<16x32xf32, #tpu.memory_space<vmem>>, %arg3: memref<1x32xf32, #tpu.memory_space<vmem>>, %arg4: memref<32x32xf32, #tpu.memory_space<vmem>>, %arg5: memref<1x32xf32, #tpu.memory_space<vmem>>, %arg6: memref<32x4xf32, #tpu.memory_space<vmem>>, %arg7: memref<1x4xf32, #tpu.memory_space<vmem>>, %arg8: memref<8x4xf32, #tpu.memory_space<vmem>>) attributes {dimension_semantics = [#tpu.dimension_semantics<parallel>], iteration_bounds = array<i64: 1>, scalar_prefetch = 0 : i64, scratch_operands = 0 : i64, tpu.core_type = #tpu.core_type<tc>, window_params = [{transform_indices = @transform_0, window_bounds = array<i64: 8, 16>}, {pipeline_mode = #tpu.pipeline_mode<synchronous>, transform_indices = @transform_1, window_bounds = array<i64: 16, 32>}, {pipeline_mode = #tpu.pipeline_mode<synchronous>, transform_indices = @transform_2, window_bounds = array<i64: 1, 32>}, {pipeline_mode = #tpu.pipeline_mode<synchronous>, transform_indices = @transform_3, window_bounds = array<i64: 32, 32>}, {pipeline_mode = #tpu.pipeline_mode<synchronous>, transform_indices = @transform_4, window_bounds = array<i64: 1, 32>}, {pipeline_mode = #tpu.pipeline_mode<synchronous>, transform_indices = @transform_5, window_bounds = array<i64: 32, 4>}, {pipeline_mode = #tpu.pipeline_mode<synchronous>, transform_indices = @transform_6, window_bounds = array<i64: 1, 4>}, {transform_indices = @transform_7, window_bounds = array<i64: 8, 4>}]} {
    %c0 = arith.constant 0 : index
    %c0_0 = arith.constant 0 : index
    %0 = vector.load %arg1[%c0, %c0_0] : memref<8x16xf32, #tpu.memory_space<vmem>>, vector<8x16xf32>
    %c0_1 = arith.constant 0 : index
    %c0_2 = arith.constant 0 : index
    %1 = vector.load %arg2[%c0_1, %c0_2] : memref<16x32xf32, #tpu.memory_space<vmem>>, vector<16x32xf32>
    %cst = arith.constant dense<0.000000e+00> : vector<8x32xf32>
    %2 = tpu.matmul %0, %1, %cst {dimension_numbers = #tpu.dot_dimension_numbers<[1], [0], [0], [1], [0, 0, 1, 1], [], []>} : vector<8x16xf32>, vector<16x32xf32>, vector<8x32xf32> -> vector<8x32xf32>
    %c0_3 = arith.constant 0 : index
    %c0_4 = arith.constant 0 : index
    %3 = vector.load %arg3[%c0_3, %c0_4] : memref<1x32xf32, #tpu.memory_space<vmem>>, vector<1x32xf32>
    %4 = vector.broadcast %3 : vector<1x32xf32> to vector<8x32xf32>
    %5 = arith.addf %2, %4 : vector<8x32xf32>
    %cst_5 = arith.constant 0.000000e+00 : f32
    %6 = vector.broadcast %cst_5 : f32 to vector<8x32xf32>
    %7 = arith.cmpf ogt, %5, %6 : vector<8x32xf32>
    %cst_6 = arith.constant 0.00999999977 : f32
    %8 = vector.broadcast %cst_6 : f32 to vector<8x32xf32>
    %9 = arith.mulf %8, %5 : vector<8x32xf32>
    %10 = arith.select %7, %5, %9 : vector<8x32xi1>, vector<8x32xf32>
    %c0_7 = arith.constant 0 : index
    %c0_8 = arith.constant 0 : index
    %11 = vector.load %arg4[%c0_7, %c0_8] : memref<32x32xf32, #tpu.memory_space<vmem>>, vector<32x32xf32>
    %cst_9 = arith.constant dense<0.000000e+00> : vector<8x32xf32>
    %12 = tpu.matmul %10, %11, %cst_9 {dimension_numbers = #tpu.dot_dimension_numbers<[1], [0], [0], [1], [0, 0, 1, 1], [], []>} : vector<8x32xf32>, vector<32x32xf32>, vector<8x32xf32> -> vector<8x32xf32>
    %c0_10 = arith.constant 0 : index
    %c0_11 = arith.constant 0 : index
    %13 = vector.load %arg5[%c0_10, %c0_11] : memref<1x32xf32, #tpu.memory_space<vmem>>, vector<1x32xf32>
    %14 = vector.broadcast %13 : vector<1x32xf32> to vector<8x32xf32>
    %15 = arith.addf %12, %14 : vector<8x32xf32>
    %cst_12 = arith.constant 0.000000e+00 : f32
    %16 = vector.broadcast %cst_12 : f32 to vector<8x32xf32>
    %17 = arith.cmpf ogt, %15, %16 : vector<8x32xf32>
    %cst_13 = arith.constant 0.00999999977 : f32
    %18 = vector.broadcast %cst_13 : f32 to vector<8x32xf32>
    %19 = arith.mulf %18, %15 : vector<8x32xf32>
    %20 = arith.select %17, %15, %19 : vector<8x32xi1>, vector<8x32xf32>
    %c0_14 = arith.constant 0 : index
    %c0_15 = arith.constant 0 : index
    %21 = vector.load %arg6[%c0_14, %c0_15] : memref<32x4xf32, #tpu.memory_space<vmem>>, vector<32x4xf32>
    %cst_16 = arith.constant dense<0.000000e+00> : vector<8x4xf32>
    %22 = tpu.matmul %20, %21, %cst_16 {dimension_numbers = #tpu.dot_dimension_numbers<[1], [0], [0], [1], [0, 0, 1, 1], [], []>} : vector<8x32xf32>, vector<32x4xf32>, vector<8x4xf32> -> vector<8x4xf32>
    %c0_17 = arith.constant 0 : index
    %c0_18 = arith.constant 0 : index
    %23 = vector.load %arg7[%c0_17, %c0_18] : memref<1x4xf32, #tpu.memory_space<vmem>>, vector<1x4xf32>
    %24 = vector.broadcast %23 : vector<1x4xf32> to vector<8x4xf32>
    %25 = arith.addf %22, %24 : vector<8x4xf32>
    %cst_19 = arith.constant dense<0xFF800000> : vector<8xf32>
    %26 = vector.multi_reduction <maximumf>, %25, %cst_19 [1] : vector<8x4xf32> to vector<8xf32>
    %27 = vector.shape_cast %26 : vector<8xf32> to vector<8x1xf32>
    %28 = vector.broadcast %27 : vector<8x1xf32> to vector<8x4xf32>
    %29 = arith.subf %25, %28 : vector<8x4xf32>
    %30 = math.exp %29 : vector<8x4xf32>
    %cst_20 = arith.constant dense<0.000000e+00> : vector<8xf32>
    %31 = vector.multi_reduction <add>, %30, %cst_20 [1] : vector<8x4xf32> to vector<8xf32>
    %32 = vector.shape_cast %31 : vector<8xf32> to vector<8x1xf32>
    %33 = vector.broadcast %32 : vector<8x1xf32> to vector<8x4xf32>
    %34 = arith.divf %30, %33 : vector<8x4xf32>
    %c0_21 = arith.constant 0 : index
    %c0_22 = arith.constant 0 : index
    %35 = vector.load %arg8[%c0_21, %c0_22] : memref<8x4xf32, #tpu.memory_space<vmem>>, vector<8x4xf32>
    tpu.vector_store %arg8[%c0_21, %c0_22], %34 {strides = array<i32>} : memref<8x4xf32, #tpu.memory_space<vmem>>, vector<8x4xf32>,
    return
  }
  func.func @transform_0(%arg0: i32) -> (i32, i32) {
    %c0_i32 = arith.constant 0 : i32
    %c0_i32_0 = arith.constant 0 : i32
    return %arg0, %c0_i32 : i32, i32
  }
  func.func @transform_1(%arg0: i32) -> (i32, i32) {
    %c0_i32 = arith.constant 0 : i32
    %c0_i32_0 = arith.constant 0 : i32
    %c0_i32_1 = arith.constant 0 : i32
    return %c0_i32, %c0_i32_0 : i32, i32
  }
  func.func @transform_2(%arg0: i32) -> (i32, i32) {
    %c0_i32 = arith.constant 0 : i32
    %c0_i32_0 = arith.constant 0 : i32
    %c0_i32_1 = arith.constant 0 : i32
    return %c0_i32, %c0_i32_0 : i32, i32
  }
  func.func @transform_3(%arg0: i32) -> (i32, i32) {
    %c0_i32 = arith.constant 0 : i32
    %c0_i32_0 = arith.constant 0 : i32
    %c0_i32_1 = arith.constant 0 : i32
    return %c0_i32, %c0_i32_0 : i32, i32
  }
  func.func @transform_4(%arg0: i32) -> (i32, i32) {
    %c0_i32 = arith.constant 0 : i32
    %c0_i32_0 = arith.constant 0 : i32
    %c0_i32_1 = arith.constant 0 : i32
    return %c0_i32, %c0_i32_0 : i32, i32
  }
  func.func @transform_5(%arg0: i32) -> (i32, i32) {
    %c0_i32 = arith.constant 0 : i32
    %c0_i32_0 = arith.constant 0 : i32
    %c0_i32_1 = arith.constant 0 : i32
    return %c0_i32, %c0_i32_0 : i32, i32
  }
  func.func @transform_6(%arg0: i32) -> (i32, i32) {
    %c0_i32 = arith.constant 0 : i32
    %c0_i32_0 = arith.constant 0 : i32
    %c0_i32_1 = arith.constant 0 : i32
    return %c0_i32, %c0_i32_0 : i32, i32
  }
  func.func @transform_7(%arg0: i32) -> (i32, i32) {
    %c0_i32 = arith.constant 0 : i32
    %c0_i32_0 = arith.constant 0 : i32
    return %arg0, %c0_i32 : i32, i32
  }
}

</mosaic_0001>

<llo_original>
// kernel: tpu_custom_call.1
$region0: #{tpu_custom_call.1}
  #allocation0 [shape = 'u32[]', space=smem, size = 0x4, offset = 0x4, fixed_abs, tag = 'smem constant byte address 0x4 - core index']
  #allocation1 [shape = 'u32[144,128]{1,0:T(1,128)}', space=vmem, size = 0x12000, scoped, tag = 'internal scratch']
  %s0 = inlined_call_operand.vmem [shape: f32[8,16], index: 0, kind: input, shape index: {}]
  %s1 = inlined_call_operand.hbm [shape: f32[16,32], index: 1, kind: input, shape index: {}]
  %s2 = inlined_call_operand.vmem [shape: f32[1,32], index: 2, kind: input, shape index: {}]
  %s3 = inlined_call_operand.vmem [shape: f32[32,32], index: 3, kind: input, shape index: {}]
  %s4 = inlined_call_operand.vmem [shape: f32[1,32], index: 4, kind: input, shape index: {}]
  %s5 = inlined_call_operand.vmem [shape: f32[32,4], index: 5, kind: input, shape index: {}]
  %s6 = inlined_call_operand.vmem [shape: f32[1,4], index: 6, kind: input, shape index: {}]
  %s7 = inlined_call_operand.vmem [shape: f32[8,4], index: 7, kind: output, shape index: {}]
  %s8 = sld [smem:[#allocation0]]
  $region42: #{tpu_custom_call.1} parent=0
    _
  %s10 = ssub.s32 1, %s8
  %s11 = scalar_select 0, %s10, %s8
  $region1: #{tpu_custom_call.1} parent=0
    #allocation2 [shape = 'u8[8192]{0}', space=vmem, size = 0x2000, scoped, tag = 'input window, operand 1, single buffered']
    #allocation3 [shape = 's32[1]{0}', space=sflag, size = 0x4, scoped, tag = 'scoped memory for tpu_custom_call.1']
    %12 = vsyncpa [#allocation3], 0
    // Predicated region
    $region2: #{tpu_custom_call.1} parent=1 // pred_check
      _
    $region3: #{tpu_custom_call.1} parent=1 // pred_check_branch
      %14 = sbr.rel (0) target = $region5
    $region4: #{tpu_custom_call.1} parent=1 // pred_region
      _
    $region5: #{tpu_custom_call.1} parent=1 // pred_fallthru
      _
    // Predicated region
    $region6: #{tpu_custom_call.1} parent=1 // pred_check
      _
    $region7: #{tpu_custom_call.1} parent=1 // pred_check_branch
      %16 = sbr.rel (0) target = $region9
    $region8: #{tpu_custom_call.1} parent=1 // pred_region
      %s18 = ssub.s32 256, 256
      %19 = vsyncadd [#allocation3], %s18
      %s20 = sshll.u32 [#allocation2], 4
      %s21 = int_to_ptr.vmem [resolvable:$true] %s20
      %26 = dma.hbm_to_vmem [thread:$0]  %s1, 256, %s21, [#allocation3], 128, 128, 8
    $region9: #{tpu_custom_call.1} parent=1 // pred_fallthru
      _
    // Predicated region
    $region10: #{tpu_custom_call.1} parent=1 // pred_check
      _
    $region11: #{tpu_custom_call.1} parent=1 // pred_check_branch
      %28 = sbr.rel (0) target = $region13
    $region12: #{tpu_custom_call.1} parent=1 // pred_region
      _
    $region13: #{tpu_custom_call.1} parent=1 // pred_fallthru
      _
    // Predicated region
    $region14: #{tpu_custom_call.1} parent=1 // pred_check
      _
    $region15: #{tpu_custom_call.1} parent=1 // pred_check_branch
      %30 = sbr.rel (0) target = $region17
    $region16: #{tpu_custom_call.1} parent=1 // pred_region
      _
    $region17: #{tpu_custom_call.1} parent=1 // pred_fallthru
      _
    // Predicated region
    $region18: #{tpu_custom_call.1} parent=1 // pred_check
      _
    $region19: #{tpu_custom_call.1} parent=1 // pred_check_branch
      %32 = sbr.rel (0) target = $region21
    $region20: #{tpu_custom_call.1} parent=1 // pred_region
      _
    $region21: #{tpu_custom_call.1} parent=1 // pred_fallthru
      _
    // Predicated region
    $region22: #{tpu_custom_call.1} parent=1 // pred_check
      _
    $region23: #{tpu_custom_call.1} parent=1 // pred_check_branch
      %34 = sbr.rel (0) target = $region25
    $region24: #{tpu_custom_call.1} parent=1 // pred_region
      _
    $region25: #{tpu_custom_call.1} parent=1 // pred_fallthru
      _
    // Predicated region
    $region26: #{tpu_custom_call.1} parent=1 // pred_check
      _
    $region27: #{tpu_custom_call.1} parent=1 // pred_check_branch
      %36 = sbr.rel (0) target = $region29
    $region28: #{tpu_custom_call.1} parent=1 // pred_region
      _
    $region29: #{tpu_custom_call.1} parent=1 // pred_fallthru
      _
    // Predicated region
    $region30: #{tpu_custom_call.1} parent=1 // pred_check
      _
    $region31: #{tpu_custom_call.1} parent=1 // pred_check_branch
      %38 = sbr.rel (0) target = $region33
    $region32: #{tpu_custom_call.1} parent=1 // pred_region
      %39 = dma.done [#allocation3], 256
    $region33: #{tpu_custom_call.1} parent=1 // pred_fallthru
      _
    %v40 = vld [vmem:[%s0] sm:$0xff]
    %v41 = vld [vmem:[#allocation2] sm:$0xff]
    %v42 = vld [vmem:[#allocation2 + $0x8] sm:$0xff]
    %v43 = vld [vmem:[%s2] sm:$0x1]
    %v45 = vlaneseq
    %v46 = vshrl.u32 %v45, 7
    %v47 = vsub.s32 0, %v46
    %v48 = vrot.slane %v43, %v47
    %vm50 = vcmask 130048
    %v52 = vsel %vm50, %v40, 0
    %54 = vmatprep.subr.mxu0 0.0
    %55 = vmatpush1.msra.mxu0 %v41
    %56 = vmatprep.subr.mxu0 0.0
    %57 = vmatpush1.msra.mxu0 %v42
    %58 = vmatprep.subr.mxu0 0.0
    %59 = vmatpush1.msra.mxu0 0.0
    %60 = vmatprep.subr.mxu0 0.0
    %61 = vmatpush1.msra.mxu0 0.0
    %62 = vmatprep.subr.mxu0 0.0
    %63 = vmatpush1.msra.mxu0 0.0
    %64 = vmatprep.subr.mxu0 0.0
    %65 = vmatpush1.msra.mxu0 0.0
    %66 = vmatprep.subr.mxu0 0.0
    %67 = vmatpush1.msra.mxu0 0.0
    %68 = vmatprep.subr.mxu0 0.0
    %69 = vmatpush1.msra.mxu0 0.0
    %70 = vmatprep.subr.mxu0 0.0
    %71 = vmatpush1.msra.mxu0 0.0
    %72 = vmatprep.subr.mxu0 0.0
    %73 = vmatpush1.msra.mxu0 0.0
    %74 = vmatprep.subr.mxu0 0.0
    %75 = vmatpush1.msra.mxu0 0.0
    %76 = vmatprep.subr.mxu0 0.0
    %77 = vmatpush1.msra.mxu0 0.0
    %78 = vmatprep.subr.mxu0 0.0
    %79 = vmatpush1.msra.mxu0 0.0
    %80 = vmatprep.subr.mxu0 0.0
    %81 = vmatpush1.msra.mxu0 0.0
    %82 = vmatprep.subr.mxu0 0.0
    %83 = vmatpush1.msra.mxu0 0.0
    %84 = vmatprep.subr.mxu0 0.0
    %85 = vmatpush1.msra.mxu0 0.0
    %86 = vmatprep.subr.mxu0 0.0
    %87 = vmatpush1.msra.mxu0 0.0
    %88 = vmatprep.subr.mxu0 0.0
    %89 = vmatpush1.msra.mxu0 0.0
    %90 = vmatprep.subr.mxu0 0.0
    %91 = vmatpush1.msra.mxu0 0.0
    %92 = vmatprep.subr.mxu0 0.0
    %93 = vmatpush1.msra.mxu0 0.0
    %94 = vmatprep.subr.mxu0 0.0
    %95 = vmatpush1.msra.mxu0 0.0
    %96 = vmatprep.subr.mxu0 0.0
    %97 = vmatpush1.msra.mxu0 0.0
    %98 = vmatprep.subr.mxu0 0.0
    %99 = vmatpush1.msra.mxu0 0.0
    %100 = vmatprep.subr.mxu0 0.0
    %101 = vmatpush1.msra.mxu0 0.0
    %102 = vmatprep.subr.mxu0 0.0
    %103 = vmatpush1.msra.mxu0 0.0
    %104 = vmatprep.subr.mxu0 0.0
    %105 = vmatpush1.msra.mxu0 0.0
    %106 = vmatprep.subr.mxu0 0.0
    %107 = vmatpush1.msra.mxu0 0.0
    %108 = vmatprep.subr.mxu0 0.0
    %109 = vmatpush1.msra.mxu0 0.0
    %110 = vmatprep.subr.mxu0 0.0
    %111 = vmatpush1.msra.mxu0 0.0
    %112 = vmatprep.subr.mxu0 0.0
    %113 = vmatpush1.msra.mxu0 0.0
    %114 = vmatprep.subr.mxu0 0.0
    %115 = vmatpush1.msra.mxu0 0.0
    %116 = vmatprep.subr.mxu0 0.0
    %117 = vmatpush1.msra.mxu0 0.0
    %118 = vmatprep.mubr.f32.mxu0 0.0
    %119 = vmatmul.mubr.f32.gmra.mrb[0].mxu0 %v52
    %v120 = vpop.f32.mrb[0].mxu0
    %v121 = vadd.f32 %v48, %v120
    %v122 = vpop.f32.mrb[0].mxu0
    %123 = vdwg.mxu0
    %vm124 = vcmp.gt.f32.partialorder %v121, 0.0
    %v125 = vmul.f32 %v121, 0.01
    %v126 = vsel %vm124, %v121, %v125
    %v127 = vld [vmem:[%s3] sm:$0xff]
    %v128 = vld [vmem:[%s3 + $0x8] sm:$0xff]
    %v129 = vld [vmem:[%s3 + $0x10] sm:$0xff]
    %v130 = vld [vmem:[%s3 + $0x18] sm:$0xff]
    %v131 = vld [vmem:[%s4] sm:$0x1]
    %v133 = vlaneseq
    %v134 = vshrl.u32 %v133, 7
    %v135 = vsub.s32 0, %v134
    %v136 = vrot.slane %v131, %v135
    %vm138 = vcmask 261120
    %v140 = vsel %vm138, %v126, 0
    %142 = vmatprep.subr.mxu0 0.0
    %143 = vmatpush1.msra.mxu0 %v127
    %144 = vmatprep.subr.mxu0 0.0
    %145 = vmatpush1.msra.mxu0 %v128
    %146 = vmatprep.subr.mxu0 0.0
    %147 = vmatpush1.msra.mxu0 %v129
    %148 = vmatprep.subr.mxu0 0.0
    %149 = vmatpush1.msra.mxu0 %v130
    %150 = vmatprep.subr.mxu0 0.0
    %151 = vmatpush1.msra.mxu0 0.0
    %152 = vmatprep.subr.mxu0 0.0
    %153 = vmatpush1.msra.mxu0 0.0
    %154 = vmatprep.subr.mxu0 0.0
    %155 = vmatpush1.msra.mxu0 0.0
    %156 = vmatprep.subr.mxu0 0.0
    %157 = vmatpush1.msra.mxu0 0.0
    %158 = vmatprep.subr.mxu0 0.0
    %159 = vmatpush1.msra.mxu0 0.0
    %160 = vmatprep.subr.mxu0 0.0
    %161 = vmatpush1.msra.mxu0 0.0
    %162 = vmatprep.subr.mxu0 0.0
    %163 = vmatpush1.msra.mxu0 0.0
    %164 = vmatprep.subr.mxu0 0.0
    %165 = vmatpush1.msra.mxu0 0.0
    %166 = vmatprep.subr.mxu0 0.0
    %167 = vmatpush1.msra.mxu0 0.0
    %168 = vmatprep.subr.mxu0 0.0
    %169 = vmatpush1.msra.mxu0 0.0
    %170 = vmatprep.subr.mxu0 0.0
    %171 = vmatpush1.msra.mxu0 0.0
    %172 = vmatprep.subr.mxu0 0.0
    %173 = vmatpush1.msra.mxu0 0.0
    %174 = vmatprep.subr.mxu0 0.0
    %175 = vmatpush1.msra.mxu0 0.0
    %176 = vmatprep.subr.mxu0 0.0
    %177 = vmatpush1.msra.mxu0 0.0
    %178 = vmatprep.subr.mxu0 0.0
    %179 = vmatpush1.msra.mxu0 0.0
    %180 = vmatprep.subr.mxu0 0.0
    %181 = vmatpush1.msra.mxu0 0.0
    %182 = vmatprep.subr.mxu0 0.0
    %183 = vmatpush1.msra.mxu0 0.0
    %184 = vmatprep.subr.mxu0 0.0
    %185 = vmatpush1.msra.mxu0 0.0
    %186 = vmatprep.subr.mxu0 0.0
    %187 = vmatpush1.msra.mxu0 0.0
    %188 = vmatprep.subr.mxu0 0.0
    %189 = vmatpush1.msra.mxu0 0.0
    %190 = vmatprep.subr.mxu0 0.0
    %191 = vmatpush1.msra.mxu0 0.0
    %192 = vmatprep.subr.mxu0 0.0
    %193 = vmatpush1.msra.mxu0 0.0
    %194 = vmatprep.subr.mxu0 0.0
    %195 = vmatpush1.msra.mxu0 0.0
    %196 = vmatprep.subr.mxu0 0.0
    %197 = vmatpush1.msra.mxu0 0.0
    %198 = vmatprep.subr.mxu0 0.0
    %199 = vmatpush1.msra.mxu0 0.0
    %200 = vmatprep.subr.mxu0 0.0
    %201 = vmatpush1.msra.mxu0 0.0
    %202 = vmatprep.subr.mxu0 0.0
    %203 = vmatpush1.msra.mxu0 0.0
    %204 = vmatprep.subr.mxu0 0.0
    %205 = vmatpush1.msra.mxu0 0.0
    %206 = vmatprep.mubr.f32.mxu0 0.0
    %207 = vmatmul.mubr.f32.gmra.mrb[0].mxu0 %v140
    %v208 = vpop.f32.mrb[0].mxu0
    %v209 = vadd.f32 %v136, %v208
    %v210 = vpop.f32.mrb[0].mxu0
    %211 = vdwg.mxu0
    %vm212 = vcmp.gt.f32.partialorder %v209, 0.0
    %v213 = vmul.f32 %v209, 0.01
    %v214 = vsel %vm212, %v209, %v213
    %v215 = vld [vmem:[%s5] sm:$0xff]
    %v216 = vld [vmem:[%s5 + $0x8] sm:$0xff]
    %v217 = vld [vmem:[%s5 + $0x10] sm:$0xff]
    %v218 = vld [vmem:[%s5 + $0x18] sm:$0xff]
    %v219 = vld [vmem:[%s6] sm:$0x1]
    %v221 = vlaneseq
    %v222 = vshrl.u32 %v221, 7
    %v223 = vsub.s32 0, %v222
    %v224 = vrot.slane %v219, %v223
    %v227 = vsel %vm138, %v214, 0
    %229 = vmatprep.subr.mxu0 0.0
    %230 = vmatpush1.msra.mxu0 %v215
    %231 = vmatprep.subr.mxu0 0.0
    %232 = vmatpush1.msra.mxu0 %v216
    %233 = vmatprep.subr.mxu0 0.0
    %234 = vmatpush1.msra.mxu0 %v217
    %235 = vmatprep.subr.mxu0 0.0
    %236 = vmatpush1.msra.mxu0 %v218
    %237 = vmatprep.subr.mxu0 0.0
    %238 = vmatpush1.msra.mxu0 0.0
    %239 = vmatprep.subr.mxu0 0.0
    %240 = vmatpush1.msra.mxu0 0.0
    %241 = vmatprep.subr.mxu0 0.0
    %242 = vmatpush1.msra.mxu0 0.0
    %243 = vmatprep.subr.mxu0 0.0
    %244 = vmatpush1.msra.mxu0 0.0
    %245 = vmatprep.subr.mxu0 0.0
    %246 = vmatpush1.msra.mxu0 0.0
    %247 = vmatprep.subr.mxu0 0.0
    %248 = vmatpush1.msra.mxu0 0.0
    %249 = vmatprep.subr.mxu0 0.0
    %250 = vmatpush1.msra.mxu0 0.0
    %251 = vmatprep.subr.mxu0 0.0
    %252 = vmatpush1.msra.mxu0 0.0
    %253 = vmatprep.subr.mxu0 0.0
    %254 = vmatpush1.msra.mxu0 0.0
    %255 = vmatprep.subr.mxu0 0.0
    %256 = vmatpush1.msra.mxu0 0.0
    %257 = vmatprep.subr.mxu0 0.0
    %258 = vmatpush1.msra.mxu0 0.0
    %259 = vmatprep.subr.mxu0 0.0
    %260 = vmatpush1.msra.mxu0 0.0
    %261 = vmatprep.subr.mxu0 0.0
    %262 = vmatpush1.msra.mxu0 0.0
    %263 = vmatprep.subr.mxu0 0.0
    %264 = vmatpush1.msra.mxu0 0.0
    %265 = vmatprep.subr.mxu0 0.0
    %266 = vmatpush1.msra.mxu0 0.0
    %267 = vmatprep.subr.mxu0 0.0
    %268 = vmatpush1.msra.mxu0 0.0
    %269 = vmatprep.subr.mxu0 0.0
    %270 = vmatpush1.msra.mxu0 0.0
    %271 = vmatprep.subr.mxu0 0.0
    %272 = vmatpush1.msra.mxu0 0.0
    %273 = vmatprep.subr.mxu0 0.0
    %274 = vmatpush1.msra.mxu0 0.0
    %275 = vmatprep.subr.mxu0 0.0
    %276 = vmatpush1.msra.mxu0 0.0
    %277 = vmatprep.subr.mxu0 0.0
    %278 = vmatpush1.msra.mxu0 0.0
    %279 = vmatprep.subr.mxu0 0.0
    %280 = vmatpush1.msra.mxu0 0.0
    %281 = vmatprep.subr.mxu0 0.0
    %282 = vmatpush1.msra.mxu0 0.0
    %283 = vmatprep.subr.mxu0 0.0
    %284 = vmatpush1.msra.mxu0 0.0
    %285 = vmatprep.subr.mxu0 0.0
    %286 = vmatpush1.msra.mxu0 0.0
    %287 = vmatprep.subr.mxu0 0.0
    %288 = vmatpush1.msra.mxu0 0.0
    %289 = vmatprep.subr.mxu0 0.0
    %290 = vmatpush1.msra.mxu0 0.0
    %291 = vmatprep.subr.mxu0 0.0
    %292 = vmatpush1.msra.mxu0 0.0
    %293 = vmatprep.mubr.f32.mxu0 0.0
    %294 = vmatmul.mubr.f32.gmra.mrb[0].mxu0 %v227
    %v295 = vpop.f32.mrb[0].mxu0
    %v296 = vadd.f32 %v224, %v295
    %v297 = vpop.f32.mrb[0].mxu0
    %298 = vdwg.mxu0
    %vm299 = vcmask 31744
    %v300 = vsel %vm299, %v296, -inf
    %301 = vmax.xlane.f32.xlu0 %v300
    %v302 = vpop.xlane.xlu0 %301
    %v303 = vsub.f32 %v296, %v302
    %v304 = vmul.f32 %v303, 1.442695
    %v305 = vpow.pop %v304
    %v306 = vsel %vm299, %v305, 0.0
    %307 = vadd.xlane.f32.xlu0 %v306
    %v308 = vpop.xlane.xlu0 %307
    %v309 = vrcp.pop %v308
    %v310 = vmul.f32 %v305, %v309
    %311 = vst.msk [vmem:[%s7] sm:$0xff] %vm299, %v310
    // Predicated region
    $region34: #{tpu_custom_call.1} parent=1 // pred_check
      _
    $region35: #{tpu_custom_call.1} parent=1 // pred_check_branch
      %313 = sbr.rel (0) target = $region37
    $region36: #{tpu_custom_call.1} parent=1 // pred_region
      _
    $region37: #{tpu_custom_call.1} parent=1 // pred_fallthru
      _
    // Predicated region
    $region38: #{tpu_custom_call.1} parent=1 // pred_check
      _
    $region39: #{tpu_custom_call.1} parent=1 // pred_check_branch
      %315 = sbr.rel (0) target = $region41
    $region40: #{tpu_custom_call.1} parent=1 // pred_region
      _
    $region41: #{tpu_custom_call.1} parent=1 // pred_fallthru
      _
    %316 = vsyncpa [#allocation3], 1

</llo_original>
